<compile_context>
chip_gen: v7x
topology: tpu7x:2x2x1
jax: 0.10.0
libtpu: 0.0.40
codegen_flags: <defaults>
</compile_context>

<pallas_src>
import functools

import jax
import jax.numpy as jnp
import numpy as np
from jax.experimental import pallas as pl
from jax.experimental.pallas import tpu as pltpu

BN_EPS = 1e-5  # torch BatchNorm1d default


def glu_layer_kernel(x_ref, wt_ref, gamma_ref, beta_ref, out_ref, *,
                     cs, chunks_per_step, n_rows, output_dim, ragged):
    """One grid step processes `chunks_per_step` ghost-batch chunks.

    x_ref:     (G, cs, input_dim)       f32   ghost-batch chunks of the input
    wt_ref:    (input_dim, 2*out_dim)   bf16  pre-transposed fc weight (resident)
    gamma_ref: (1, 2*out_dim)           f32   BN affine scale (resident)
    beta_ref:  (1, 2*out_dim)           f32   BN affine shift (resident)
    out_ref:   (G, cs, output_dim)      bf16
    """
    w = wt_ref[...]
    gamma = gamma_ref[...]
    beta = beta_ref[...]
    base = pl.program_id(0) * chunks_per_step   # global index of first chunk in block

    # Static unroll over the (small, <= 8) chunks in this block; per-chunk GBN stats
    # fall out naturally and every op below is a plain 2-D Mosaic op.
    for g in range(chunks_per_step):
        # fc (no bias): (cs, in) bf16 @ (in, 2*out) bf16 -> f32 accumulate on the MXU.
        y = jnp.dot(x_ref[g].astype(jnp.bfloat16), w,
                    preferred_element_type=jnp.float32)           # (cs, 2*out) f32

        # Ghost BatchNorm, training-mode stats, one pass (sum and sum-of-squares).
        # Zero-padded tail rows produce exactly 0 in y (bias-free fc), so they drop
        # out of both sums; only the divisor differs on the globally last chunk.
        s1 = jnp.sum(y, axis=0, keepdims=True)                    # (1, 2*out)  XLU
        s2 = jnp.sum(y * y, axis=0, keepdims=True)                # (1, 2*out)  XLU
        if ragged:
            rows_left = n_rows - (base + g) * cs                  # scalar int math
            cnt = jnp.clip(rows_left, 1, cs).astype(jnp.float32)
            mean = s1 / cnt
            ex2 = s2 / cnt
        else:
            inv_n = 1.0 / cs                                      # trace-time constant
            mean = s1 * inv_n
            ex2 = s2 * inv_n
        var = ex2 - mean * mean                                   # biased var (torch BN)

        # Fused BN apply: z = y * scale + shift  (2 full-tile VALU passes).
        scale = gamma * jax.lax.rsqrt(var + BN_EPS)               # (1, 2*out)
        shift = beta - mean * scale
        z = y * scale + shift

        # GLU: first half * sigmoid(second half). With output_dim a multiple of 128 the
        # split points and the store are lane-dense.
        a = z[:, :output_dim]
        b = z[:, output_dim:]
        sig = pl.reciprocal(1.0 + jnp.exp(-b), approx=False)      # exact; EUP-fed exp
        out_ref[g] = (a * sig).astype(out_ref.dtype)


def glu_layer(x, wt, gamma, beta, *, output_dim, virtual_batch_size=128,
              max_chunks_per_step=8, out_dtype=jnp.bfloat16):
    """x: (B, input_dim) f32; wt: (input_dim, 2*output_dim) pre-transposed bf16 fc
    weight; gamma/beta: (1, 2*output_dim) f32 BN affine params."""
    B, input_dim = x.shape
    two_d = wt.shape[1]
    assert two_d == 2 * output_dim
    assert gamma.shape == (1, two_d) and beta.shape == (1, two_d)

    # torch.chunk(ceil(B/vbs)) semantics: equal chunks of cs = ceil(B / n_requested)
    # rows, last chunk possibly smaller.
    n_req = pl.cdiv(B, virtual_batch_size)
    cs = pl.cdiv(B, n_req)                      # actual per-chunk rows (torch.chunk size)
    n_chunks = pl.cdiv(B, cs)
    padded_rows = n_chunks * cs
    ragged = padded_rows != B

    # Chunks per grid step: keep 2x(x block f32) + 2x(out block bf16) + the per-chunk
    # f32 temporaries well under VMEM on every generation (v7x: 64 MiB physical).
    bytes_per_chunk = cs * (input_dim * 4 * 2        # x block, f32, double-buffered
                            + output_dim * 2 * 2     # out block, bf16, double-buffered
                            + two_d * 4 * 4)         # (cs, 2*out) f32 temporaries
    vmem_budget = 24 * 1024 * 1024
    g = max(1, min(max_chunks_per_step, n_chunks, vmem_budget // max(bytes_per_chunk, 1)))
    if n_chunks > 1:
        g = min(g, (n_chunks + 1) // 2)              # keep >= 2 grid steps (v7x megacore)
    num_steps = pl.cdiv(n_chunks, g)

    # View (and zero-pad a ragged tail of) x as (n_chunks, cs, input_dim) so each grid
    # step DMAs whole chunks; padded rows drop out of the in-kernel statistics.
    x3 = jnp.pad(x, ((0, padded_rows - B), (0, 0))) if ragged else x
    x3 = x3.reshape(n_chunks, cs, input_dim)

    kernel = functools.partial(glu_layer_kernel, cs=cs, chunks_per_step=g,
                               n_rows=B, output_dim=output_dim, ragged=ragged)
    out3 = pl.pallas_call(
        kernel,
        out_shape=jax.ShapeDtypeStruct((n_chunks, cs, output_dim), out_dtype),
        grid=(num_steps,),
        in_specs=[
            pl.BlockSpec((g, cs, input_dim), lambda i: (i, 0, 0)),   # G chunks / step
            pl.BlockSpec((input_dim, two_d), lambda i: (0, 0)),      # weight, resident
            pl.BlockSpec((1, two_d), lambda i: (0, 0)),              # gamma, resident
            pl.BlockSpec((1, two_d), lambda i: (0, 0)),              # beta, resident
        ],
        out_specs=pl.BlockSpec((g, cs, output_dim), lambda i: (i, 0, 0)),
        compiler_params=pltpu.CompilerParams(
            dimension_semantics=("parallel",),
            # above v5e's 16 MiB scoped default, under v7x's 64 MiB physical VMEM
            vmem_limit_bytes=48 * 1024 * 1024),
    )(x3, wt, gamma, beta)

    out = out3.reshape(padded_rows, output_dim)
    return out[:B] if ragged else out


if __name__ == "__main__":
    def reference(x, wt, gamma, beta, output_dim, vbs):
        # Pure-JAX reference mirroring the PyTorch module in train() mode (torch.chunk
        # semantics), with the same bf16-rounded matmul operands the kernel uses.
        B = x.shape[0]
        n_req = int(np.ceil(B / vbs))
        cs = int(np.ceil(B / n_req))
        y = jnp.dot(x.astype(jnp.bfloat16).astype(jnp.float32), wt.astype(jnp.float32))
        outs = []
        for start in range(0, B, cs):
            yc = y[start:start + cs]
            mean = yc.mean(axis=0, keepdims=True)
            var = jnp.mean((yc - mean) ** 2, axis=0, keepdims=True)
            z = (yc - mean) / jnp.sqrt(var + BN_EPS) * gamma + beta
            a, b = z[:, :output_dim], z[:, output_dim:]
            outs.append(a * (1.0 / (1.0 + jnp.exp(-b))))
        return jnp.concatenate(outs, axis=0)

    input_dim, output_dim = 32, 128
    two_d = 2 * output_dim
    vbs = 128

    key = jax.random.PRNGKey(0)
    k_x1, k_x2, k_w = jax.random.split(key, 3)

    # initialize_glu: xavier_normal_ with gain = sqrt((in + 2*out)/sqrt(in)) on the
    # (2*out, in) bias-free fc weight. Transposed + cast to bf16 ONCE at parameter
    # creation time; gamma/beta are BatchNorm1d defaults.
    gain = np.sqrt((input_dim + two_d) / np.sqrt(input_dim))
    std = gain * np.sqrt(2.0 / (input_dim + two_d))
    w = std * jax.random.normal(k_w, (two_d, input_dim), jnp.float32)
    wt = jnp.asarray(w.T, jnp.bfloat16)               # (input_dim, 2*output_dim)
    gamma = jnp.ones((1, two_d), jnp.float32)
    beta = jnp.zeros((1, two_d), jnp.float32)

    # Case 1: evenly chunked batch (4 chunks of 128 rows -> 2 grid steps x 2 chunks).
    B1 = 512
    x1 = jax.random.normal(k_x1, (B1, input_dim), jnp.float32)
    out1 = jax.block_until_ready(
        glu_layer(x1, wt, gamma, beta, output_dim=output_dim, virtual_batch_size=vbs))
    ref1 = reference(x1, wt, gamma, beta, output_dim, vbs)
    assert out1.shape == (B1, output_dim) and out1.dtype == jnp.bfloat16
    np.testing.assert_allclose(np.asarray(out1.astype(jnp.float32)),
                               np.asarray(ref1), rtol=2e-2, atol=2e-2)

    # Case 2: ragged batch with torch.chunk semantics (B=201, vbs=128 -> two chunks of
    # 101 and 100 rows; last chunk zero-padded inside the wrapper).
    B2 = 201
    x2 = jax.random.normal(k_x2, (B2, input_dim), jnp.float32)
    out2 = jax.block_until_ready(
        glu_layer(x2, wt, gamma, beta, output_dim=output_dim, virtual_batch_size=vbs))
    ref2 = reference(x2, wt, gamma, beta, output_dim, vbs)
    assert out2.shape == (B2, output_dim)
    np.testing.assert_allclose(np.asarray(out2.astype(jnp.float32)),
                               np.asarray(ref2), rtol=2e-2, atol=2e-2)

    print("KERNEL_OK")
</pallas_src>

<mosaic_0001>
module attributes {stable_mosaic.version = 11 : i64} {
  func.func @glu_layer_kernel(%arg0: i32, %arg1: memref<2x128x32xf32, #tpu.memory_space<vmem>>, %arg2: memref<32x256xbf16, #tpu.memory_space<vmem>>, %arg3: memref<1x256xf32, #tpu.memory_space<vmem>>, %arg4: memref<1x256xf32, #tpu.memory_space<vmem>>, %arg5: memref<2x128x128xbf16, #tpu.memory_space<vmem>>) attributes {dimension_semantics = [#tpu.dimension_semantics<parallel>], iteration_bounds = array<i64: 2>, scalar_prefetch = 0 : i64, scratch_operands = 0 : i64, tpu.core_type = #tpu.core_type<tc>, window_params = [{transform_indices = @transform_0, window_bounds = array<i64: 2, 128, 32>}, {pipeline_mode = #tpu.pipeline_mode<synchronous>, transform_indices = @transform_1, window_bounds = array<i64: 32, 256>}, {pipeline_mode = #tpu.pipeline_mode<synchronous>, transform_indices = @transform_2, window_bounds = array<i64: 1, 256>}, {pipeline_mode = #tpu.pipeline_mode<synchronous>, transform_indices = @transform_3, window_bounds = array<i64: 1, 256>}, {transform_indices = @transform_4, window_bounds = array<i64: 2, 128, 128>}]} {
    %c0 = arith.constant 0 : index
    %c0_0 = arith.constant 0 : index
    %0 = vector.load %arg2[%c0, %c0_0] : memref<32x256xbf16, #tpu.memory_space<vmem>>, vector<32x256xbf16>
    %c0_1 = arith.constant 0 : index
    %c0_2 = arith.constant 0 : index
    %1 = vector.load %arg3[%c0_1, %c0_2] : memref<1x256xf32, #tpu.memory_space<vmem>>, vector<1x256xf32>
    %c0_3 = arith.constant 0 : index
    %c0_4 = arith.constant 0 : index
    %2 = vector.load %arg4[%c0_3, %c0_4] : memref<1x256xf32, #tpu.memory_space<vmem>>, vector<1x256xf32>
    %c0_5 = arith.constant 0 : index
    %c0_6 = arith.constant 0 : index
    %c0_7 = arith.constant 0 : index
    %3 = vector.load %arg1[%c0_5, %c0_6, %c0_7] : memref<2x128x32xf32, #tpu.memory_space<vmem>>, vector<1x128x32xf32>
    %4 = vector.shape_cast %3 : vector<1x128x32xf32> to vector<128x32xf32>
    %5 = arith.truncf %4 : vector<128x32xf32> to vector<128x32xbf16>
    %cst = arith.constant dense<0.000000e+00> : vector<128x256xf32>
    %6 = tpu.matmul %5, %0, %cst {dimension_numbers = #tpu.dot_dimension_numbers<[1], [0], [0], [1], [0, 0, 1, 1], [], []>} : vector<128x32xbf16>, vector<32x256xbf16>, vector<128x256xf32> -> vector<128x256xf32>
    %cst_8 = arith.constant dense<0.000000e+00> : vector<256xf32>
    %7 = vector.multi_reduction <add>, %6, %cst_8 [0] : vector<128x256xf32> to vector<256xf32>
    %8 = vector.shape_cast %7 : vector<256xf32> to vector<1x256xf32>
    %9 = arith.mulf %6, %6 : vector<128x256xf32>
    %cst_9 = arith.constant dense<0.000000e+00> : vector<256xf32>
    %10 = vector.multi_reduction <add>, %9, %cst_9 [0] : vector<128x256xf32> to vector<256xf32>
    %11 = vector.shape_cast %10 : vector<256xf32> to vector<1x256xf32>
    %cst_10 = arith.constant 7.812500e-03 : f32
    %12 = vector.broadcast %cst_10 : f32 to vector<1x256xf32>
    %13 = arith.mulf %8, %12 : vector<1x256xf32>
    %cst_11 = arith.constant 7.812500e-03 : f32
    %14 = vector.broadcast %cst_11 : f32 to vector<1x256xf32>
    %15 = arith.mulf %11, %14 : vector<1x256xf32>
    %16 = arith.mulf %13, %13 : vector<1x256xf32>
    %17 = arith.subf %15, %16 : vector<1x256xf32>
    %cst_12 = arith.constant 9.99999974E-6 : f32
    %18 = vector.broadcast %cst_12 : f32 to vector<1x256xf32>
    %19 = arith.addf %17, %18 : vector<1x256xf32>
    %20 = math.rsqrt %19 : vector<1x256xf32>
    %21 = arith.mulf %1, %20 : vector<1x256xf32>
    %22 = arith.mulf %13, %21 : vector<1x256xf32>
    %23 = arith.subf %2, %22 : vector<1x256xf32>
    %24 = vector.broadcast %21 : vector<1x256xf32> to vector<128x256xf32>
    %25 = arith.mulf %6, %24 : vector<128x256xf32>
    %26 = vector.broadcast %23 : vector<1x256xf32> to vector<128x256xf32>
    %27 = arith.addf %25, %26 : vector<128x256xf32>
    %28 = vector.extract_strided_slice %27 {offsets = [0, 0], sizes = [128, 128], strides = [1, 1]} : vector<128x256xf32> to vector<128x128xf32>
    %29 = vector.extract_strided_slice %27 {offsets = [0, 128], sizes = [128, 128], strides = [1, 1]} : vector<128x256xf32> to vector<128x128xf32>
    %cst_13 = arith.constant 0.000000e+00 : f32
    %30 = vector.broadcast %cst_13 : f32 to vector<128x128xf32>
    %31 = arith.subf %30, %29 : vector<128x128xf32>
    %32 = math.exp %31 : vector<128x128xf32>
    %cst_14 = arith.constant 1.000000e+00 : f32
    %33 = vector.broadcast %cst_14 : f32 to vector<128x128xf32>
    %34 = arith.addf %33, %32 : vector<128x128xf32>
    %35 = tpu.reciprocal %34 : vector<128x128xf32> -> vector<128x128xf32>
    %36 = arith.mulf %28, %35 : vector<128x128xf32>
    %37 = arith.truncf %36 : vector<128x128xf32> to vector<128x128xbf16>
    %c0_15 = arith.constant 0 : index
    %c0_16 = arith.constant 0 : index
    %c0_17 = arith.constant 0 : index
    %38 = vector.load %arg5[%c0_15, %c0_16, %c0_17] : memref<2x128x128xbf16, #tpu.memory_space<vmem>>, vector<1x128x128xbf16>
    %39 = vector.shape_cast %38 : vector<1x128x128xbf16> to vector<128x128xbf16>
    %40 = vector.shape_cast %37 : vector<128x128xbf16> to vector<1x128x128xbf16>
    tpu.vector_store %arg5[%c0_15, %c0_16, %c0_17], %40 {strides = array<i32>} : memref<2x128x128xbf16, #tpu.memory_space<vmem>>, vector<1x128x128xbf16>,
    %c1 = arith.constant 1 : index
    %c0_18 = arith.constant 0 : index
    %c0_19 = arith.constant 0 : index
    %41 = vector.load %arg1[%c1, %c0_18, %c0_19] : memref<2x128x32xf32, #tpu.memory_space<vmem>>, vector<1x128x32xf32>
    %42 = vector.shape_cast %41 : vector<1x128x32xf32> to vector<128x32xf32>
    %43 = arith.truncf %42 : vector<128x32xf32> to vector<128x32xbf16>
    %cst_20 = arith.constant dense<0.000000e+00> : vector<128x256xf32>
    %44 = tpu.matmul %43, %0, %cst_20 {dimension_numbers = #tpu.dot_dimension_numbers<[1], [0], [0], [1], [0, 0, 1, 1], [], []>} : vector<128x32xbf16>, vector<32x256xbf16>, vector<128x256xf32> -> vector<128x256xf32>
    %cst_21 = arith.constant dense<0.000000e+00> : vector<256xf32>
    %45 = vector.multi_reduction <add>, %44, %cst_21 [0] : vector<128x256xf32> to vector<256xf32>
    %46 = vector.shape_cast %45 : vector<256xf32> to vector<1x256xf32>
    %47 = arith.mulf %44, %44 : vector<128x256xf32>
    %cst_22 = arith.constant dense<0.000000e+00> : vector<256xf32>
    %48 = vector.multi_reduction <add>, %47, %cst_22 [0] : vector<128x256xf32> to vector<256xf32>
    %49 = vector.shape_cast %48 : vector<256xf32> to vector<1x256xf32>
    %cst_23 = arith.constant 7.812500e-03 : f32
    %50 = vector.broadcast %cst_23 : f32 to vector<1x256xf32>
    %51 = arith.mulf %46, %50 : vector<1x256xf32>
    %cst_24 = arith.constant 7.812500e-03 : f32
    %52 = vector.broadcast %cst_24 : f32 to vector<1x256xf32>
    %53 = arith.mulf %49, %52 : vector<1x256xf32>
    %54 = arith.mulf %51, %51 : vector<1x256xf32>
    %55 = arith.subf %53, %54 : vector<1x256xf32>
    %cst_25 = arith.constant 9.99999974E-6 : f32
    %56 = vector.broadcast %cst_25 : f32 to vector<1x256xf32>
    %57 = arith.addf %55, %56 : vector<1x256xf32>
    %58 = math.rsqrt %57 : vector<1x256xf32>
    %59 = arith.mulf %1, %58 : vector<1x256xf32>
    %60 = arith.mulf %51, %59 : vector<1x256xf32>
    %61 = arith.subf %2, %60 : vector<1x256xf32>
    %62 = vector.broadcast %59 : vector<1x256xf32> to vector<128x256xf32>
    %63 = arith.mulf %44, %62 : vector<128x256xf32>
    %64 = vector.broadcast %61 : vector<1x256xf32> to vector<128x256xf32>
    %65 = arith.addf %63, %64 : vector<128x256xf32>
    %66 = vector.extract_strided_slice %65 {offsets = [0, 0], sizes = [128, 128], strides = [1, 1]} : vector<128x256xf32> to vector<128x128xf32>
    %67 = vector.extract_strided_slice %65 {offsets = [0, 128], sizes = [128, 128], strides = [1, 1]} : vector<128x256xf32> to vector<128x128xf32>
    %cst_26 = arith.constant 0.000000e+00 : f32
    %68 = vector.broadcast %cst_26 : f32 to vector<128x128xf32>
    %69 = arith.subf %68, %67 : vector<128x128xf32>
    %70 = math.exp %69 : vector<128x128xf32>
    %cst_27 = arith.constant 1.000000e+00 : f32
    %71 = vector.broadcast %cst_27 : f32 to vector<128x128xf32>
    %72 = arith.addf %71, %70 : vector<128x128xf32>
    %73 = tpu.reciprocal %72 : vector<128x128xf32> -> vector<128x128xf32>
    %74 = arith.mulf %66, %73 : vector<128x128xf32>
    %75 = arith.truncf %74 : vector<128x128xf32> to vector<128x128xbf16>
    %c1_28 = arith.constant 1 : index
    %c0_29 = arith.constant 0 : index
    %c0_30 = arith.constant 0 : index
    %76 = vector.load %arg5[%c1_28, %c0_29, %c0_30] : memref<2x128x128xbf16, #tpu.memory_space<vmem>>, vector<1x128x128xbf16>
    %77 = vector.shape_cast %76 : vector<1x128x128xbf16> to vector<128x128xbf16>
    %78 = vector.shape_cast %75 : vector<128x128xbf16> to vector<1x128x128xbf16>
    tpu.vector_store %arg5[%c1_28, %c0_29, %c0_30], %78 {strides = array<i32>} : memref<2x128x128xbf16, #tpu.memory_space<vmem>>, vector<1x128x128xbf16>,
    return
  }
  func.func @transform_0(%arg0: i32) -> (i32, i32, i32) {
    %c0_i32 = arith.constant 0 : i32
    %c0_i32_0 = arith.constant 0 : i32
    %c0_i32_1 = arith.constant 0 : i32
    return %arg0, %c0_i32, %c0_i32_0 : i32, i32, i32
  }
  func.func @transform_1(%arg0: i32) -> (i32, i32) {
    %c0_i32 = arith.constant 0 : i32
    %c0_i32_0 = arith.constant 0 : i32
    %c0_i32_1 = arith.constant 0 : i32
    return %c0_i32, %c0_i32_0 : i32, i32
  }
  func.func @transform_2(%arg0: i32) -> (i32, i32) {
    %c0_i32 = arith.constant 0 : i32
    %c0_i32_0 = arith.constant 0 : i32
    %c0_i32_1 = arith.constant 0 : i32
    return %c0_i32, %c0_i32_0 : i32, i32
  }
  func.func @transform_3(%arg0: i32) -> (i32, i32) {
    %c0_i32 = arith.constant 0 : i32
    %c0_i32_0 = arith.constant 0 : i32
    %c0_i32_1 = arith.constant 0 : i32
    return %c0_i32, %c0_i32_0 : i32, i32
  }
  func.func @transform_4(%arg0: i32) -> (i32, i32, i32) {
    %c0_i32 = arith.constant 0 : i32
    %c0_i32_0 = arith.constant 0 : i32
    %c0_i32_1 = arith.constant 0 : i32
    return %arg0, %c0_i32, %c0_i32_0 : i32, i32, i32
  }
}

</mosaic_0001>

<llo_original>
// kernel: tpu_custom_call.1
$region0: #{tpu_custom_call.1}
  #allocation0 [shape = 'u32[]', space=smem, size = 0x4, offset = 0x4, fixed_abs, tag = 'smem constant byte address 0x4 - core index']
  #allocation1 [shape = 'u32[144,128]{1,0:T(1,128)}', space=vmem, size = 0x12000, scoped, tag = 'internal scratch']
  %s0 = inlined_call_operand.vmem [shape: f32[4,128,32], index: 0, kind: input, shape index: {}]
  %s1 = inlined_call_operand.vmem [shape: bf16[32,256], index: 1, kind: input, shape index: {}]
  %s2 = inlined_call_operand.vmem [shape: f32[1,256], index: 2, kind: input, shape index: {}]
  %s3 = inlined_call_operand.vmem [shape: f32[1,256], index: 3, kind: input, shape index: {}]
  %s4 = inlined_call_operand.hbm [shape: bf16[4,128,128], index: 4, kind: output, shape index: {}]
  %s5 = sld [smem:[#allocation0]]
  $region49: #{tpu_custom_call.1} parent=0
    _
  %s7 = ssub.s32 1, %s5
  %s8 = scalar_select 0, %s7, %s5
  $region1: #{tpu_custom_call.1} parent=0
    #allocation2 [shape = 'u8[131072]{0}', space=vmem, size = 0x20000, scoped, tag = 'output window, operand 0']
    #allocation3 [shape = 's32[2]{0}', space=sflag, size = 0x8, scoped, tag = 'scoped memory for tpu_custom_call.1']
    %9 = vsyncpa [#allocation3], 0
    %s10 = scalar_lea.sflag [#allocation3], 1
    %11 = vsyncpa %s10, 0
    loop: start=0, step=1, limit=4
    $region2: #{tpu_custom_call.1} parent=1 // loop_pre_header
      _
    $region3: #{tpu_custom_call.1} parent=1 // loop_header
      %s13 = sphi 0, %s17
      %p14 = scmp.ge.s32.totalorder %s13, 4
      %s23 = sphi 0, %s25
      %s26 = sphi 0, %s23
      %s27 = sphi 0, %s26
      %s43 = sphi 0, %s27
      %s47 = sphi 0, %s47
      %s49 = sphi 0, %s47
      %s50 = sphi 0, %s49
      %s64 = sphi 0, %s50
      %s68 = sphi 0, %s68
      %s70 = sphi 0, %s68
      %s71 = sphi 0, %s70
      %s85 = sphi 0, %s71
      %s89 = sphi 0, %s89
      %s91 = sphi 0, %s89
      %s92 = sphi 0, %s91
      %s106 = sphi 0, %s92
      %s112 = sphi 0, %s114
      %s115 = sphi 0, %s112
      %s116 = sphi 0, %s115
      %s132 = sphi 0, %s116
    $region4: #{tpu_custom_call.1} parent=1 // loop_header_branch
      %16 = sbr.rel (%p14) target = $region8
    $region5: #{tpu_custom_call.1} parent=1 // loop_body
      %s18 = ssub.s32 %s13, 1
      %s19 = ssub.s32 %s13, 2
      %s20 = sadd.s32 %s13, 1
      %s21 = ssub.s32 %s13, %s20
      %p22 = scmp.eq.s32.totalorder %s21, 0
      %s24 = sadd.s32 %s23, 1
      %s25 = scalar_select %p22, %s23, %s24
      %p28 = pneg %p22
      %p29 = scmp.eq.s32.totalorder %s13, 1
      %p30 = por %p28, %p29
      %p31 = scmp.ne.s32.totalorder %s23, %s26
      %p32 = scmp.eq.s32.totalorder %s13, 0
      %p33 = por %p31, %p32
      %p34 = scmp.ne.s32.totalorder %s23, %s26
      %p35 = scmp.eq.s32.totalorder %s18, 1
      %p36 = por %p34, %p35
      %p37 = scmp.ne.s32.totalorder %s26, %s27
      %p38 = scmp.eq.s32.totalorder %s18, 0
      %p39 = por %p37, %p38
      %p40 = scmp.ne.s32.totalorder %s26, %s27
      %p41 = scmp.eq.s32.totalorder %s19, 1
      %p42 = por %p40, %p41
      %p44 = scmp.ne.s32.totalorder %s27, %s43
      %p45 = scmp.eq.s32.totalorder %s19, 0
      %p46 = por %p44, %p45
      %s48 = sadd.s32 %s47, 1
      %p51 = scmp.eq.s32.totalorder %s13, 1
      %p52 = scmp.ne.s32.totalorder %s47, %s49
      %p53 = scmp.eq.s32.totalorder %s13, 0
      %p54 = por %p52, %p53
      %p55 = scmp.ne.s32.totalorder %s47, %s49
      %p56 = scmp.eq.s32.totalorder %s18, 1
      %p57 = por %p55, %p56
      %p58 = scmp.ne.s32.totalorder %s49, %s50
      %p59 = scmp.eq.s32.totalorder %s18, 0
      %p60 = por %p58, %p59
      %p61 = scmp.ne.s32.totalorder %s49, %s50
      %p62 = scmp.eq.s32.totalorder %s19, 1
      %p63 = por %p61, %p62
      %p65 = scmp.ne.s32.totalorder %s50, %s64
      %p66 = scmp.eq.s32.totalorder %s19, 0
      %p67 = por %p65, %p66
      %s69 = sadd.s32 %s68, 1
      %p72 = scmp.eq.s32.totalorder %s13, 1
      %p73 = scmp.ne.s32.totalorder %s68, %s70
      %p74 = scmp.eq.s32.totalorder %s13, 0
      %p75 = por %p73, %p74
      %p76 = scmp.ne.s32.totalorder %s68, %s70
      %p77 = scmp.eq.s32.totalorder %s18, 1
      %p78 = por %p76, %p77
      %p79 = scmp.ne.s32.totalorder %s70, %s71
      %p80 = scmp.eq.s32.totalorder %s18, 0
      %p81 = por %p79, %p80
      %p82 = scmp.ne.s32.totalorder %s70, %s71
      %p83 = scmp.eq.s32.totalorder %s19, 1
      %p84 = por %p82, %p83
      %p86 = scmp.ne.s32.totalorder %s71, %s85
      %p87 = scmp.eq.s32.totalorder %s19, 0
      %p88 = por %p86, %p87
      %s90 = sadd.s32 %s89, 1
      %p93 = scmp.eq.s32.totalorder %s13, 1
      %p94 = scmp.ne.s32.totalorder %s89, %s91
      %p95 = scmp.eq.s32.totalorder %s13, 0
      %p96 = por %p94, %p95
      %p97 = scmp.ne.s32.totalorder %s89, %s91
      %p98 = scmp.eq.s32.totalorder %s18, 1
      %p99 = por %p97, %p98
      %p100 = scmp.ne.s32.totalorder %s91, %s92
      %p101 = scmp.eq.s32.totalorder %s18, 0
      %p102 = por %p100, %p101
      %p103 = scmp.ne.s32.totalorder %s91, %s92
      %p104 = scmp.eq.s32.totalorder %s19, 1
      %p105 = por %p103, %p104
      %p107 = scmp.ne.s32.totalorder %s92, %s106
      %p108 = scmp.eq.s32.totalorder %s19, 0
      %p109 = por %p107, %p108
      %s110 = ssub.s32 %s13, %s20
      %p111 = scmp.eq.s32.totalorder %s110, 0
      %s113 = sadd.s32 %s112, 1
      %s114 = scalar_select %p111, %s112, %s113
      %p117 = pneg %p111
      %p118 = scmp.eq.s32.totalorder %s13, 1
      %p119 = por %p117, %p118
      %p120 = scmp.ne.s32.totalorder %s112, %s115
      %p121 = scmp.eq.s32.totalorder %s13, 0
      %p122 = por %p120, %p121
      %p123 = scmp.ne.s32.totalorder %s112, %s115
      %p124 = scmp.eq.s32.totalorder %s18, 1
      %p125 = por %p123, %p124
      %p126 = scmp.ne.s32.totalorder %s115, %s116
      %p127 = scmp.eq.s32.totalorder %s18, 0
      %p128 = por %p126, %p127
      %p129 = scmp.ne.s32.totalorder %s115, %s116
      %p130 = scmp.eq.s32.totalorder %s19, 1
      %p131 = por %p129, %p130
      %p133 = scmp.ne.s32.totalorder %s116, %s132
      %p134 = scmp.eq.s32.totalorder %s19, 0
      %p135 = por %p133, %p134
      %p136 = scmp.le.s32.totalorder 1, %s13
      %p137 = scmp.lt.s32.totalorder %s13, 3
      %p138 = pnand %p136, %p137
      %p139 = pneg %p138
      // Predicated region
      $region9: #{tpu_custom_call.1} parent=5 // pred_check
        _
      $region10: #{tpu_custom_call.1} parent=5 // pred_check_branch
        %141 = sbr.rel (%p138) target = $region12
      $region11: #{tpu_custom_call.1} parent=5 // pred_region
        %s142 = ssub.s32 %s13, 1
        // Predicated region
        $region13: #{tpu_custom_call.1} parent=11 // pred_check
          %p143 = pneg %p60
        $region14: #{tpu_custom_call.1} parent=11 // pred_check_branch
          %145 = sbr.rel (%p143) target = $region16
        $region15: #{tpu_custom_call.1} parent=11 // pred_region
          _
        $region16: #{tpu_custom_call.1} parent=11 // pred_fallthru
          _
        // Predicated region
        $region17: #{tpu_custom_call.1} parent=11 // pred_check
          %p146 = pneg %p81
        $region18: #{tpu_custom_call.1} parent=11 // pred_check_branch
          %148 = sbr.rel (%p146) target = $region20
        $region19: #{tpu_custom_call.1} parent=11 // pred_region
          _
        $region20: #{tpu_custom_call.1} parent=11 // pred_fallthru
          _
        // Predicated region
        $region21: #{tpu_custom_call.1} parent=11 // pred_check
          %p149 = pneg %p102
        $region22: #{tpu_custom_call.1} parent=11 // pred_check_branch
          %151 = sbr.rel (%p149) target = $region24
        $region23: #{tpu_custom_call.1} parent=11 // pred_region
          _
        $region24: #{tpu_custom_call.1} parent=11 // pred_fallthru
          _
      $region12: #{tpu_custom_call.1} parent=5 // pred_fallthru
        _
      %p152 = scmp.lt.s32.totalorder %s13, 2
      // Predicated region
      $region25: #{tpu_custom_call.1} parent=5 // pred_check
        %p153 = pneg %p152
      $region26: #{tpu_custom_call.1} parent=5 // pred_check_branch
        %155 = sbr.rel (%p153) target = $region28
      $region27: #{tpu_custom_call.1} parent=5 // pred_region
        // Predicated region
        $region29: #{tpu_custom_call.1} parent=27 // pred_check
          %p156 = pneg %p33
        $region30: #{tpu_custom_call.1} parent=27 // pred_check_branch
          %158 = sbr.rel (%p156) target = $region32
        $region31: #{tpu_custom_call.1} parent=27 // pred_region
          %s159 = smul.u32 2, %s13
          %p160 = scmp.lt.s32.totalorder %s159, 3
          %s161 = scalar_select %p160, %s159, 3
          %s162 = smul.addr %s161, 16
          %s163 = smul.addr %s162, 8
          %s164 = scalar_lea.vmem %s0, %s163
          %s165 = smul.u32 2, %s13
        $region32: #{tpu_custom_call.1} parent=27 // pred_fallthru
          _
      $region28: #{tpu_custom_call.1} parent=5 // pred_fallthru
        _
      %p166 = scmp.le.s32.totalorder 1, %s13
      %p167 = scmp.lt.s32.totalorder %s13, 3
      %p168 = pnand %p166, %p167
      %p169 = pneg %p168
      // Predicated region
      $region33: #{tpu_custom_call.1} parent=5 // pred_check
        _
      $region34: #{tpu_custom_call.1} parent=5 // pred_check_branch
        %171 = sbr.rel (%p168) target = $region36
      $region35: #{tpu_custom_call.1} parent=5 // pred_region
        %s172 = ssub.s32 %s13, 1
        %s173 = smul.u32 2, %s18
        %p174 = scmp.lt.s32.totalorder %s173, 3
        %s175 = scalar_select %p174, %s173, 3
        %s176 = smul.addr %s175, 16
        %s177 = smul.addr %s176, 8
        %s178 = scalar_lea.vmem %s0, %s177
        %p179 = pneg %p39
        %p180 = pneg %p36
        %p181 = pneg %p60
        %p182 = pneg %p57
        %p183 = pneg %p81
        %p184 = pneg %p78
        %p185 = pneg %p102
        %p186 = pneg %p99
        %p187 = pneg %p128
        %p188 = pneg %p125
        %s189 = sand.u32 %s115, 1
        %s190 = scalar_lea.sflag [#allocation3], %s189
        %s191 = sand.u32 %s115, 1
        %s192 = smul.addr %s191, 128
        %s193 = scalar_lea.vmem [#allocation2], %s192
        %s194 = smul.u32 2, %s18
        %p195 = scmp.lt.s32.totalorder %s194, 3
        %s196 = scalar_select %p195, %s194, 3
        %s197 = smul.addr %s196, 16
        %s198 = smul.addr %s197, 8
        %s199 = scalar_lea.vmem %s0, %s198
        %s200 = smul.u32 2, %s18
        %s201 = smul.u32 2, %s18
        %v203 = vld [vmem:[%s1] sm:$0xff]
        %v204 = vld [vmem:[%s1 + $0x8] sm:$0xff]
        %v205 = vld [vmem:[%s1 + $0x10] sm:$0xff]
        %v206 = vld [vmem:[%s1 + $0x18] sm:$0xff]
        %v207 = vld [vmem:[%s2] sm:$0x3]
        %v208 = vld [vmem:[%s3] sm:$0x3]
        %v209 = vld [vmem:[%s199] sm:$0xff]
        %v210 = vld [vmem:[%s199 + $0x8] sm:$0xff]
        %v211 = vld [vmem:[%s199 + $0x10] sm:$0xff]
        %v212 = vld [vmem:[%s199 + $0x18] sm:$0xff]
        %v213 = vld [vmem:[%s199 + $0x20] sm:$0xff]
        %v214 = vld [vmem:[%s199 + $0x28] sm:$0xff]
        %v215 = vld [vmem:[%s199 + $0x30] sm:$0xff]
        %v216 = vld [vmem:[%s199 + $0x38] sm:$0xff]
        %v217 = vld [vmem:[%s199 + $0x40] sm:$0xff]
        %v218 = vld [vmem:[%s199 + $0x48] sm:$0xff]
        %v219 = vld [vmem:[%s199 + $0x50] sm:$0xff]
        %v220 = vld [vmem:[%s199 + $0x58] sm:$0xff]
        %v221 = vld [vmem:[%s199 + $0x60] sm:$0xff]
        %v222 = vld [vmem:[%s199 + $0x68] sm:$0xff]
        %v223 = vld [vmem:[%s199 + $0x70] sm:$0xff]
        %v224 = vld [vmem:[%s199 + $0x78] sm:$0xff]
        %v225 = vpack.c.bf16 %v210, %v209
        %v226 = vpack.c.bf16 %v212, %v211
        %v227 = vpack.c.bf16 %v214, %v213
        %v228 = vpack.c.bf16 %v216, %v215
        %v229 = vpack.c.bf16 %v218, %v217
        %v230 = vpack.c.bf16 %v220, %v219
        %v231 = vpack.c.bf16 %v222, %v221
        %v232 = vpack.c.bf16 %v224, %v223
        %v237 = vunpack.c.l.b16 %v203
        %v238 = vunpack.c.h.b16 %v203
        %v239 = vunpack.c.l.b16 %v204
        %v240 = vunpack.c.h.b16 %v204
        %v241 = vunpack.c.l.b16 %v205
        %v242 = vunpack.c.h.b16 %v205
        %v243 = vunpack.c.l.b16 %v206
        %v244 = vunpack.c.h.b16 %v206
        %v245 = vpack.c.b16 %v239, %v237
        %v246 = vpack.c.b16 %v240, %v238
        %v247 = vpack.c.b16 %v243, %v241
        %v248 = vpack.c.b16 %v244, %v242
        %vm253 = vcmask 261120
        %v255 = vsel %vm253, %v225, 0
        %v258 = vsel %vm253, %v226, 0
        %v261 = vsel %vm253, %v227, 0
        %v264 = vsel %vm253, %v228, 0
        %v267 = vsel %vm253, %v229, 0
        %v270 = vsel %vm253, %v230, 0
        %v273 = vsel %vm253, %v231, 0
        %v276 = vsel %vm253, %v232, 0
        %278 = vmatprep.subr.bf16.mxu0 %v246
        %279 = vmatpush1.bf16.msra.mxu0 %v245
        %280 = vmatprep.subr.bf16.mxu0 %v248
        %281 = vmatpush1.bf16.msra.mxu0 %v247
        %282 = vmatprep.subr.bf16.mxu0 0
        %283 = vmatpush1.bf16.msra.mxu0 0
        %284 = vmatprep.subr.bf16.mxu0 0
        %285 = vmatpush1.bf16.msra.mxu0 0
        %286 = vmatprep.subr.bf16.mxu0 0
        %287 = vmatpush1.bf16.msra.mxu0 0
        %288 = vmatprep.subr.bf16.mxu0 0
        %289 = vmatpush1.bf16.msra.mxu0 0
        %290 = vmatprep.subr.bf16.mxu0 0
        %291 = vmatpush1.bf16.msra.mxu0 0
        %292 = vmatprep.subr.bf16.mxu0 0
        %293 = vmatpush1.bf16.msra.mxu0 0
        %294 = vmatprep.subr.bf16.mxu0 0
        %295 = vmatpush1.bf16.msra.mxu0 0
        %296 = vmatprep.subr.bf16.mxu0 0
        %297 = vmatpush1.bf16.msra.mxu0 0
        %298 = vmatprep.subr.bf16.mxu0 0
        %299 = vmatpush1.bf16.msra.mxu0 0
        %300 = vmatprep.subr.bf16.mxu0 0
        %301 = vmatpush1.bf16.msra.mxu0 0
        %302 = vmatprep.subr.bf16.mxu0 0
        %303 = vmatpush1.bf16.msra.mxu0 0
        %304 = vmatprep.subr.bf16.mxu0 0
        %305 = vmatpush1.bf16.msra.mxu0 0
        %306 = vmatprep.subr.bf16.mxu0 0
        %307 = vmatpush1.bf16.msra.mxu0 0
        %308 = vmatprep.subr.bf16.mxu0 0
        %309 = vmatpush1.bf16.msra.mxu0 0
        %310 = vmatprep.mubr.bf16.mxu0 0
        %311 = vmatmul.mubr.bf16.gmra.mrb[0].mxu0 %v255
        %v312 = vpop.f32.mrb[0].mxu0
        %v313 = vadd.f32 0.0, %v312
        %v314 = vpop.f32.mrb[0].mxu0
        %v315 = vadd.f32 0.0, %v314
        %v316 = vpop.f32.mrb[0].mxu0
        %v317 = vadd.f32 0.0, %v316
        %v318 = vpop.f32.mrb[0].mxu0
        %v319 = vadd.f32 0.0, %v318
        %320 = vmatprep.mubr.bf16.mxu0 0
        %321 = vmatmul.mubr.bf16.gmra.mrb[0].mxu0 %v258
        %v322 = vpop.f32.mrb[0].mxu0
        %v323 = vadd.f32 0.0, %v322
        %v324 = vpop.f32.mrb[0].mxu0
        %v325 = vadd.f32 0.0, %v324
        %v326 = vpop.f32.mrb[0].mxu0
        %v327 = vadd.f32 0.0, %v326
        %v328 = vpop.f32.mrb[0].mxu0
        %v329 = vadd.f32 0.0, %v328
        %330 = vmatprep.mubr.bf16.mxu0 0
        %331 = vmatmul.mubr.bf16.gmra.mrb[0].mxu0 %v261
        %v332 = vpop.f32.mrb[0].mxu0
        %v333 = vadd.f32 0.0, %v332
        %v334 = vpop.f32.mrb[0].mxu0
        %v335 = vadd.f32 0.0, %v334
        %v336 = vpop.f32.mrb[0].mxu0
        %v337 = vadd.f32 0.0, %v336
        %v338 = vpop.f32.mrb[0].mxu0
        %v339 = vadd.f32 0.0, %v338
        %340 = vmatprep.mubr.bf16.mxu0 0
        %341 = vmatmul.mubr.bf16.gmra.mrb[0].mxu0 %v264
        %v342 = vpop.f32.mrb[0].mxu0
        %v343 = vadd.f32 0.0, %v342
        %v344 = vpop.f32.mrb[0].mxu0
        %v345 = vadd.f32 0.0, %v344
        %v346 = vpop.f32.mrb[0].mxu0
        %v347 = vadd.f32 0.0, %v346
        %v348 = vpop.f32.mrb[0].mxu0
        %v349 = vadd.f32 0.0, %v348
        %350 = vmatprep.mubr.bf16.mxu0 0
        %351 = vmatmul.mubr.bf16.gmra.mrb[0].mxu0 %v267
        %v352 = vpop.f32.mrb[0].mxu0
        %v353 = vadd.f32 0.0, %v352
        %v354 = vpop.f32.mrb[0].mxu0
        %v355 = vadd.f32 0.0, %v354
        %v356 = vpop.f32.mrb[0].mxu0
        %v357 = vadd.f32 0.0, %v356
        %v358 = vpop.f32.mrb[0].mxu0
        %v359 = vadd.f32 0.0, %v358
        %360 = vmatprep.mubr.bf16.mxu0 0
        %361 = vmatmul.mubr.bf16.gmra.mrb[0].mxu0 %v270
        %v362 = vpop.f32.mrb[0].mxu0
        %v363 = vadd.f32 0.0, %v362
        %v364 = vpop.f32.mrb[0].mxu0
        %v365 = vadd.f32 0.0, %v364
        %v366 = vpop.f32.mrb[0].mxu0
        %v367 = vadd.f32 0.0, %v366
        %v368 = vpop.f32.mrb[0].mxu0
        %v369 = vadd.f32 0.0, %v368
        %370 = vmatprep.mubr.bf16.mxu0 0
        %371 = vmatmul.mubr.bf16.gmra.mrb[0].mxu0 %v273
        %v372 = vpop.f32.mrb[0].mxu0
        %v373 = vadd.f32 0.0, %v372
        %v374 = vpop.f32.mrb[0].mxu0
        %v375 = vadd.f32 0.0, %v374
        %v376 = vpop.f32.mrb[0].mxu0
        %v377 = vadd.f32 0.0, %v376
        %v378 = vpop.f32.mrb[0].mxu0
        %v379 = vadd.f32 0.0, %v378
        %380 = vmatprep.mubr.bf16.mxu0 0
        %381 = vmatmul.mubr.bf16.gmra.mrb[0].mxu0 %v276
        %v382 = vpop.f32.mrb[0].mxu0
        %v383 = vadd.f32 0.0, %v382
        %v384 = vpop.f32.mrb[0].mxu0
        %v385 = vadd.f32 0.0, %v384
        %v386 = vpop.f32.mrb[0].mxu0
        %v387 = vadd.f32 0.0, %v386
        %v388 = vpop.f32.mrb[0].mxu0
        %v389 = vadd.f32 0.0, %v388
        %390 = vdwg.mxu0
        %v391 = vadd.f32 %v313, %v317
        %v392 = vadd.f32 %v391, %v323
        %v393 = vadd.f32 %v392, %v327
        %v394 = vadd.f32 %v393, %v333
        %v395 = vadd.f32 %v394, %v337
        %v396 = vadd.f32 %v395, %v343
        %v397 = vadd.f32 %v396, %v347
        %v398 = vadd.f32 %v397, %v353
        %v399 = vadd.f32 %v398, %v357
        %v400 = vadd.f32 %v399, %v363
        %v401 = vadd.f32 %v400, %v367
        %v402 = vadd.f32 %v401, %v373
        %v403 = vadd.f32 %v402, %v377
        %v404 = vadd.f32 %v403, %v383
        %v405 = vadd.f32 %v404, %v387
        %v406 = vrot.slane %v405, 4
        %v407 = vadd.f32 %v405, %v406
        %v408 = vrot.slane %v407, 2
        %v409 = vadd.f32 %v407, %v408
        %v410 = vrot.slane %v409, 1
        %v411 = vadd.f32 %v409, %v410
        %v412 = vadd.f32 %v315, %v319
        %v413 = vadd.f32 %v412, %v325
        %v414 = vadd.f32 %v413, %v329
        %v415 = vadd.f32 %v414, %v335
        %v416 = vadd.f32 %v415, %v339
        %v417 = vadd.f32 %v416, %v345
        %v418 = vadd.f32 %v417, %v349
        %v419 = vadd.f32 %v418, %v355
        %v420 = vadd.f32 %v419, %v359
        %v421 = vadd.f32 %v420, %v365
        %v422 = vadd.f32 %v421, %v369
        %v423 = vadd.f32 %v422, %v375
        %v424 = vadd.f32 %v423, %v379
        %v425 = vadd.f32 %v424, %v385
        %v426 = vadd.f32 %v425, %v389
        %v427 = vrot.slane %v426, 4
        %v428 = vadd.f32 %v426, %v427
        %v429 = vrot.slane %v428, 2
        %v430 = vadd.f32 %v428, %v429
        %v431 = vrot.slane %v430, 1
        %v432 = vadd.f32 %v430, %v431
        %v433 = vmul.f32 %v313, %v313
        %v434 = vmul.f32 %v315, %v315
        %v435 = vmul.f32 %v317, %v317
        %v436 = vmul.f32 %v319, %v319
        %v437 = vmul.f32 %v323, %v323
        %v438 = vmul.f32 %v325, %v325
        %v439 = vmul.f32 %v327, %v327
        %v440 = vmul.f32 %v329, %v329
        %v441 = vmul.f32 %v333, %v333
        %v442 = vmul.f32 %v335, %v335
        %v443 = vmul.f32 %v337, %v337
        %v444 = vmul.f32 %v339, %v339
        %v445 = vmul.f32 %v343, %v343
        %v446 = vmul.f32 %v345, %v345
        %v447 = vmul.f32 %v347, %v347
        %v448 = vmul.f32 %v349, %v349
        %v449 = vmul.f32 %v353, %v353
        %v450 = vmul.f32 %v355, %v355
        %v451 = vmul.f32 %v357, %v357
        %v452 = vmul.f32 %v359, %v359
        %v453 = vmul.f32 %v363, %v363
        %v454 = vmul.f32 %v365, %v365
        %v455 = vmul.f32 %v367, %v367
        %v456 = vmul.f32 %v369, %v369
        %v457 = vmul.f32 %v373, %v373
        %v458 = vmul.f32 %v375, %v375
        %v459 = vmul.f32 %v377, %v377
        %v460 = vmul.f32 %v379, %v379
        %v461 = vmul.f32 %v383, %v383
        %v462 = vmul.f32 %v385, %v385
        %v463 = vmul.f32 %v387, %v387
        %v464 = vmul.f32 %v389, %v389
        %v465 = vadd.f32 %v433, %v435
        %v466 = vadd.f32 %v465, %v437
        %v467 = vadd.f32 %v466, %v439
        %v468 = vadd.f32 %v467, %v441
        %v469 = vadd.f32 %v468, %v443
        %v470 = vadd.f32 %v469, %v445
        %v471 = vadd.f32 %v470, %v447
        %v472 = vadd.f32 %v471, %v449
        %v473 = vadd.f32 %v472, %v451
        %v474 = vadd.f32 %v473, %v453
        %v475 = vadd.f32 %v474, %v455
        %v476 = vadd.f32 %v475, %v457
        %v477 = vadd.f32 %v476, %v459
        %v478 = vadd.f32 %v477, %v461
        %v479 = vadd.f32 %v478, %v463
        %v480 = vrot.slane %v479, 4
        %v481 = vadd.f32 %v479, %v480
        %v482 = vrot.slane %v481, 2
        %v483 = vadd.f32 %v481, %v482
        %v484 = vrot.slane %v483, 1
        %v485 = vadd.f32 %v483, %v484
        %v486 = vadd.f32 %v434, %v436
        %v487 = vadd.f32 %v486, %v438
        %v488 = vadd.f32 %v487, %v440
        %v489 = vadd.f32 %v488, %v442
        %v490 = vadd.f32 %v489, %v444
        %v491 = vadd.f32 %v490, %v446
        %v492 = vadd.f32 %v491, %v448
        %v493 = vadd.f32 %v492, %v450
        %v494 = vadd.f32 %v493, %v452
        %v495 = vadd.f32 %v494, %v454
        %v496 = vadd.f32 %v495, %v456
        %v497 = vadd.f32 %v496, %v458
        %v498 = vadd.f32 %v497, %v460
        %v499 = vadd.f32 %v498, %v462
        %v500 = vadd.f32 %v499, %v464
        %v501 = vrot.slane %v500, 4
        %v502 = vadd.f32 %v500, %v501
        %v503 = vrot.slane %v502, 2
        %v504 = vadd.f32 %v502, %v503
        %v505 = vrot.slane %v504, 1
        %v506 = vadd.f32 %v504, %v505
        %v507 = vmul.f32 %v411, 0.0078125
        %v508 = vmul.f32 %v432, 0.0078125
        %v509 = vmul.f32 %v485, 0.0078125
        %v510 = vmul.f32 %v506, 0.0078125
        %v511 = vmul.f32 %v507, %v507
        %v512 = vmul.f32 %v508, %v508
        %v513 = vsub.f32 %v509, %v511
        %v514 = vsub.f32 %v510, %v512
        %v515 = vadd.f32 %v513, 1e-05
        %v516 = vadd.f32 %v514, 1e-05
        %v517 = vrsqrt.pop %v515
        %v518 = vrsqrt.pop %v516
        %v521 = vcombine.low %v517, %v518
        %v523 = vunpack.c.l.s4 1966171168
        %v524 = vunpack.c.0.s8 %v523
        %v525 = vlaneseq
        %v526 = vshrl.u32 %v525, 7
        %v527 = vsub.s32 %v524, %v526
        %v528 = vrot.slane %v521, %v527
        %v530 = vunpack.c.l.s4 1966171168
        %v531 = vunpack.c.0.s8 %v530
        %v532 = vlaneseq
        %v533 = vshrl.u32 %v532, 7
        %v534 = vsub.s32 %v531, %v533
        %v535 = vrot.slane %v528, %v534
        %v537 = vmul.f32 %v207, %v535
        %v539 = vlaneseq
        %v540 = vshrl.u32 %v539, 7
        %v541 = vsub.s32 0, %v540
        %v542 = vrot.slane %v537, %v541
        %v543 = vlaneseq
        %v544 = vshrl.u32 %v543, 7
        %v545 = vsub.s32 1, %v544
        %v546 = vrot.slane %v537, %v545
        %v549 = vmul.f32 %v507, %v542
        %v550 = vmul.f32 %v508, %v546
        %v553 = vcombine.low %v549, %v550
        %v555 = vunpack.c.l.s4 1966171168
        %v556 = vunpack.c.0.s8 %v555
        %v557 = vlaneseq
        %v558 = vshrl.u32 %v557, 7
        %v559 = vsub.s32 %v556, %v558
        %v560 = vrot.slane %v553, %v559
        %v562 = vunpack.c.l.s4 1966171168
        %v563 = vunpack.c.0.s8 %v562
        %v564 = vlaneseq
        %v565 = vshrl.u32 %v564, 7
        %v566 = vsub.s32 %v563, %v565
        %v567 = vrot.slane %v560, %v566
        %v569 = vsub.f32 %v208, %v567
        %v570 = vmul.f32 %v313, %v542
        %v571 = vmul.f32 %v315, %v546
        %v572 = vmul.f32 %v317, %v542
        %v573 = vmul.f32 %v319, %v546
        %v574 = vmul.f32 %v323, %v542
        %v575 = vmul.f32 %v325, %v546
        %v576 = vmul.f32 %v327, %v542
        %v577 = vmul.f32 %v329, %v546
        %v578 = vmul.f32 %v333, %v542
        %v579 = vmul.f32 %v335, %v546
        %v580 = vmul.f32 %v337, %v542
        %v581 = vmul.f32 %v339, %v546
        %v582 = vmul.f32 %v343, %v542
        %v583 = vmul.f32 %v345, %v546
        %v584 = vmul.f32 %v347, %v542
        %v585 = vmul.f32 %v349, %v546
        %v586 = vmul.f32 %v353, %v542
        %v587 = vmul.f32 %v355, %v546
        %v588 = vmul.f32 %v357, %v542
        %v589 = vmul.f32 %v359, %v546
        %v590 = vmul.f32 %v363, %v542
        %v591 = vmul.f32 %v365, %v546
        %v592 = vmul.f32 %v367, %v542
        %v593 = vmul.f32 %v369, %v546
        %v594 = vmul.f32 %v373, %v542
        %v595 = vmul.f32 %v375, %v546
        %v596 = vmul.f32 %v377, %v542
        %v597 = vmul.f32 %v379, %v546
        %v598 = vmul.f32 %v383, %v542
        %v599 = vmul.f32 %v385, %v546
        %v600 = vmul.f32 %v387, %v542
        %v601 = vmul.f32 %v389, %v546
        %v603 = vlaneseq
        %v604 = vshrl.u32 %v603, 7
        %v605 = vsub.s32 0, %v604
        %v606 = vrot.slane %v569, %v605
        %v607 = vlaneseq
        %v608 = vshrl.u32 %v607, 7
        %v609 = vsub.s32 1, %v608
        %v610 = vrot.slane %v569, %v609
        %v613 = vadd.f32 %v570, %v606
        %v614 = vadd.f32 %v571, %v610
        %v615 = vadd.f32 %v572, %v606
        %v616 = vadd.f32 %v573, %v610
        %v617 = vadd.f32 %v574, %v606
        %v618 = vadd.f32 %v575, %v610
        %v619 = vadd.f32 %v576, %v606
        %v620 = vadd.f32 %v577, %v610
        %v621 = vadd.f32 %v578, %v606
        %v622 = vadd.f32 %v579, %v610
        %v623 = vadd.f32 %v580, %v606
        %v624 = vadd.f32 %v581, %v610
        %v625 = vadd.f32 %v582, %v606
        %v626 = vadd.f32 %v583, %v610
        %v627 = vadd.f32 %v584, %v606
        %v628 = vadd.f32 %v585, %v610
        %v629 = vadd.f32 %v586, %v606
        %v630 = vadd.f32 %v587, %v610
        %v631 = vadd.f32 %v588, %v606
        %v632 = vadd.f32 %v589, %v610
        %v633 = vadd.f32 %v590, %v606
        %v634 = vadd.f32 %v591, %v610
        %v635 = vadd.f32 %v592, %v606
        %v636 = vadd.f32 %v593, %v610
        %v637 = vadd.f32 %v594, %v606
        %v638 = vadd.f32 %v595, %v610
        %v639 = vadd.f32 %v596, %v606
        %v640 = vadd.f32 %v597, %v610
        %v641 = vadd.f32 %v598, %v606
        %v642 = vadd.f32 %v599, %v610
        %v643 = vadd.f32 %v600, %v606
        %v644 = vadd.f32 %v601, %v610
        %v645 = vsub.f32 0.0, %v614
        %v646 = vsub.f32 0.0, %v616
        %v647 = vsub.f32 0.0, %v618
        %v648 = vsub.f32 0.0, %v620
        %v649 = vsub.f32 0.0, %v622
        %v650 = vsub.f32 0.0, %v624
        %v651 = vsub.f32 0.0, %v626
        %v652 = vsub.f32 0.0, %v628
        %v653 = vsub.f32 0.0, %v630
        %v654 = vsub.f32 0.0, %v632
        %v655 = vsub.f32 0.0, %v634
        %v656 = vsub.f32 0.0, %v636
        %v657 = vsub.f32 0.0, %v638
        %v658 = vsub.f32 0.0, %v640
        %v659 = vsub.f32 0.0, %v642
        %v660 = vsub.f32 0.0, %v644
        %v661 = vmul.f32 %v645, 1.442695
        %v662 = vpow.pop %v661
        %v663 = vmul.f32 %v646, 1.442695
        %v664 = vpow.pop %v663
        %v665 = vmul.f32 %v647, 1.442695
        %v666 = vpow.pop %v665
        %v667 = vmul.f32 %v648, 1.442695
        %v668 = vpow.pop %v667
        %v669 = vmul.f32 %v649, 1.442695
        %v670 = vpow.pop %v669
        %v671 = vmul.f32 %v650, 1.442695
        %v672 = vpow.pop %v671
        %v673 = vmul.f32 %v651, 1.442695
        %v674 = vpow.pop %v673
        %v675 = vmul.f32 %v652, 1.442695
        %v676 = vpow.pop %v675
        %v677 = vmul.f32 %v653, 1.442695
        %v678 = vpow.pop %v677
        %v679 = vmul.f32 %v654, 1.442695
        %v680 = vpow.pop %v679
        %v681 = vmul.f32 %v655, 1.442695
        %v682 = vpow.pop %v681
        %v683 = vmul.f32 %v656, 1.442695
        %v684 = vpow.pop %v683
        %v685 = vmul.f32 %v657, 1.442695
        %v686 = vpow.pop %v685
        %v687 = vmul.f32 %v658, 1.442695
        %v688 = vpow.pop %v687
        %v689 = vmul.f32 %v659, 1.442695
        %v690 = vpow.pop %v689
        %v691 = vmul.f32 %v660, 1.442695
        %v692 = vpow.pop %v691
        %v693 = vadd.f32 %v662, 1.0
        %v694 = vadd.f32 %v664, 1.0
        %v695 = vadd.f32 %v666, 1.0
        %v696 = vadd.f32 %v668, 1.0
        %v697 = vadd.f32 %v670, 1.0
        %v698 = vadd.f32 %v672, 1.0
        %v699 = vadd.f32 %v674, 1.0
        %v700 = vadd.f32 %v676, 1.0
        %v701 = vadd.f32 %v678, 1.0
        %v702 = vadd.f32 %v680, 1.0
        %v703 = vadd.f32 %v682, 1.0
        %v704 = vadd.f32 %v684, 1.0
        %v705 = vadd.f32 %v686, 1.0
        %v706 = vadd.f32 %v688, 1.0
        %v707 = vadd.f32 %v690, 1.0
        %v708 = vadd.f32 %v692, 1.0
        %v709 = vrcp.pop %v693
        %v710 = vrcp.pop %v694
        %v711 = vrcp.pop %v695
        %v712 = vrcp.pop %v696
        %v713 = vrcp.pop %v697
        %v714 = vrcp.pop %v698
        %v715 = vrcp.pop %v699
        %v716 = vrcp.pop %v700
        %v717 = vrcp.pop %v701
        %v718 = vrcp.pop %v702
        %v719 = vrcp.pop %v703
        %v720 = vrcp.pop %v704
        %v721 = vrcp.pop %v705
        %v722 = vrcp.pop %v706
        %v723 = vrcp.pop %v707
        %v724 = vrcp.pop %v708
        %v725 = vmul.f32 %v613, %v709
        %v726 = vmul.f32 %v615, %v710
        %v727 = vmul.f32 %v617, %v711
        %v728 = vmul.f32 %v619, %v712
        %v729 = vmul.f32 %v621, %v713
        %v730 = vmul.f32 %v623, %v714
        %v731 = vmul.f32 %v625, %v715
        %v732 = vmul.f32 %v627, %v716
        %v733 = vmul.f32 %v629, %v717
        %v734 = vmul.f32 %v631, %v718
        %v735 = vmul.f32 %v633, %v719
        %v736 = vmul.f32 %v635, %v720
        %v737 = vmul.f32 %v637, %v721
        %v738 = vmul.f32 %v639, %v722
        %v739 = vmul.f32 %v641, %v723
        %v740 = vmul.f32 %v643, %v724
        %v741 = vpack.c.bf16 %v726, %v725
        %v742 = vpack.c.bf16 %v728, %v727
        %v743 = vpack.c.bf16 %v730, %v729
        %v744 = vpack.c.bf16 %v732, %v731
        %v745 = vpack.c.bf16 %v734, %v733
        %v746 = vpack.c.bf16 %v736, %v735
        %v747 = vpack.c.bf16 %v738, %v737
        %v748 = vpack.c.bf16 %v740, %v739
        %v757 = vunpack.c.l.b16 %v741
        %v758 = vunpack.c.h.b16 %v741
        %v759 = vunpack.c.l.b16 %v742
        %v760 = vunpack.c.h.b16 %v742
        %v761 = vunpack.c.l.b16 %v743
        %v762 = vunpack.c.h.b16 %v743
        %v763 = vunpack.c.l.b16 %v744
        %v764 = vunpack.c.h.b16 %v744
        %v765 = vunpack.c.l.b16 %v745
        %v766 = vunpack.c.h.b16 %v745
        %v767 = vunpack.c.l.b16 %v746
        %v768 = vunpack.c.h.b16 %v746
        %v769 = vunpack.c.l.b16 %v747
        %v770 = vunpack.c.h.b16 %v747
        %v771 = vunpack.c.l.b16 %v748
        %v772 = vunpack.c.h.b16 %v748
        %v773 = vpack.c.b16 %v757, %v757
        %v774 = vpack.c.b16 %v758, %v758
        %v775 = vpack.c.b16 %v759, %v759
        %v776 = vpack.c.b16 %v760, %v760
        %v777 = vpack.c.b16 %v761, %v761
        %v778 = vpack.c.b16 %v762, %v762
        %v779 = vpack.c.b16 %v763, %v763
        %v780 = vpack.c.b16 %v764, %v764
        %v781 = vpack.c.b16 %v765, %v765
        %v782 = vpack.c.b16 %v766, %v766
        %v783 = vpack.c.b16 %v767, %v767
        %v784 = vpack.c.b16 %v768, %v768
        %v785 = vpack.c.b16 %v769, %v769
        %v786 = vpack.c.b16 %v770, %v770
        %v787 = vpack.c.b16 %v771, %v771
        %v788 = vpack.c.b16 %v772, %v772
        %805 = vst [vmem:[%s193] sm:$0xf] %v773
        %806 = vst [vmem:[%s193 + $0x4] sm:$0xf] %v774
        %807 = vst [vmem:[%s193 + $0x8] sm:$0xf] %v775
        %808 = vst [vmem:[%s193 + $0xc] sm:$0xf] %v776
        %809 = vst [vmem:[%s193 + $0x10] sm:$0xf] %v777
        %810 = vst [vmem:[%s193 + $0x14] sm:$0xf] %v778
        %811 = vst [vmem:[%s193 + $0x18] sm:$0xf] %v779
        %812 = vst [vmem:[%s193 + $0x1c] sm:$0xf] %v780
        %813 = vst [vmem:[%s193 + $0x20] sm:$0xf] %v781
        %814 = vst [vmem:[%s193 + $0x24] sm:$0xf] %v782
        %815 = vst [vmem:[%s193 + $0x28] sm:$0xf] %v783
        %816 = vst [vmem:[%s193 + $0x2c] sm:$0xf] %v784
        %817 = vst [vmem:[%s193 + $0x30] sm:$0xf] %v785
        %818 = vst [vmem:[%s193 + $0x34] sm:$0xf] %v786
        %819 = vst [vmem:[%s193 + $0x38] sm:$0xf] %v787
        %820 = vst [vmem:[%s193 + $0x3c] sm:$0xf] %v788
        %s821 = scalar_lea.vmem %s199, 128
        %v822 = vld [vmem:[%s821] sm:$0xff]
        %v823 = vld [vmem:[%s821 + $0x8] sm:$0xff]
        %v824 = vld [vmem:[%s821 + $0x10] sm:$0xff]
        %v825 = vld [vmem:[%s821 + $0x18] sm:$0xff]
        %v826 = vld [vmem:[%s821 + $0x20] sm:$0xff]
        %v827 = vld [vmem:[%s821 + $0x28] sm:$0xff]
        %v828 = vld [vmem:[%s821 + $0x30] sm:$0xff]
        %v829 = vld [vmem:[%s821 + $0x38] sm:$0xff]
        %v830 = vld [vmem:[%s821 + $0x40] sm:$0xff]
        %v831 = vld [vmem:[%s821 + $0x48] sm:$0xff]
        %v832 = vld [vmem:[%s821 + $0x50] sm:$0xff]
        %v833 = vld [vmem:[%s821 + $0x58] sm:$0xff]
        %v834 = vld [vmem:[%s821 + $0x60] sm:$0xff]
        %v835 = vld [vmem:[%s821 + $0x68] sm:$0xff]
        %v836 = vld [vmem:[%s821 + $0x70] sm:$0xff]
        %v837 = vld [vmem:[%s821 + $0x78] sm:$0xff]
        %v838 = vpack.c.bf16 %v823, %v822
        %v839 = vpack.c.bf16 %v825, %v824
        %v840 = vpack.c.bf16 %v827, %v826
        %v841 = vpack.c.bf16 %v829, %v828
        %v842 = vpack.c.bf16 %v831, %v830
        %v843 = vpack.c.bf16 %v833, %v832
        %v844 = vpack.c.bf16 %v835, %v834
        %v845 = vpack.c.bf16 %v837, %v836
        %v847 = vsel %vm253, %v838, 0
        %v850 = vsel %vm253, %v839, 0
        %v853 = vsel %vm253, %v840, 0
        %v856 = vsel %vm253, %v841, 0
        %v859 = vsel %vm253, %v842, 0
        %v862 = vsel %vm253, %v843, 0
        %v865 = vsel %vm253, %v844, 0
        %v868 = vsel %vm253, %v845, 0
        %870 = vmatprep.subr.bf16.mxu0 %v246
        %871 = vmatpush1.bf16.msra.mxu0 %v245
        %872 = vmatprep.subr.bf16.mxu0 %v248
        %873 = vmatpush1.bf16.msra.mxu0 %v247
        %874 = vmatprep.subr.bf16.mxu0 0
        %875 = vmatpush1.bf16.msra.mxu0 0
        %876 = vmatprep.subr.bf16.mxu0 0
        %877 = vmatpush1.bf16.msra.mxu0 0
        %878 = vmatprep.subr.bf16.mxu0 0
        %879 = vmatpush1.bf16.msra.mxu0 0
        %880 = vmatprep.subr.bf16.mxu0 0
        %881 = vmatpush1.bf16.msra.mxu0 0
        %882 = vmatprep.subr.bf16.mxu0 0
        %883 = vmatpush1.bf16.msra.mxu0 0
        %884 = vmatprep.subr.bf16.mxu0 0
        %885 = vmatpush1.bf16.msra.mxu0 0
        %886 = vmatprep.subr.bf16.mxu0 0
        %887 = vmatpush1.bf16.msra.mxu0 0
        %888 = vmatprep.subr.bf16.mxu0 0
        %889 = vmatpush1.bf16.msra.mxu0 0
        %890 = vmatprep.subr.bf16.mxu0 0
        %891 = vmatpush1.bf16.msra.mxu0 0
        %892 = vmatprep.subr.bf16.mxu0 0
        %893 = vmatpush1.bf16.msra.mxu0 0
        %894 = vmatprep.subr.bf16.mxu0 0
        %895 = vmatpush1.bf16.msra.mxu0 0
        %896 = vmatprep.subr.bf16.mxu0 0
        %897 = vmatpush1.bf16.msra.mxu0 0
        %898 = vmatprep.subr.bf16.mxu0 0
        %899 = vmatpush1.bf16.msra.mxu0 0
        %900 = vmatprep.subr.bf16.mxu0 0
        %901 = vmatpush1.bf16.msra.mxu0 0
        %902 = vmatprep.mubr.bf16.mxu0 0
        %903 = vmatmul.mubr.bf16.gmra.mrb[0].mxu0 %v847
        %v904 = vpop.f32.mrb[0].mxu0
        %v905 = vadd.f32 0.0, %v904
        %v906 = vpop.f32.mrb[0].mxu0
        %v907 = vadd.f32 0.0, %v906
        %v908 = vpop.f32.mrb[0].mxu0
        %v909 = vadd.f32 0.0, %v908
        %v910 = vpop.f32.mrb[0].mxu0
        %v911 = vadd.f32 0.0, %v910
        %912 = vmatprep.mubr.bf16.mxu0 0
        %913 = vmatmul.mubr.bf16.gmra.mrb[0].mxu0 %v850
        %v914 = vpop.f32.mrb[0].mxu0
        %v915 = vadd.f32 0.0, %v914
        %v916 = vpop.f32.mrb[0].mxu0
        %v917 = vadd.f32 0.0, %v916
        %v918 = vpop.f32.mrb[0].mxu0
        %v919 = vadd.f32 0.0, %v918
        %v920 = vpop.f32.mrb[0].mxu0
        %v921 = vadd.f32 0.0, %v920
        %922 = vmatprep.mubr.bf16.mxu0 0
        %923 = vmatmul.mubr.bf16.gmra.mrb[0].mxu0 %v853
        %v924 = vpop.f32.mrb[0].mxu0
        %v925 = vadd.f32 0.0, %v924
        %v926 = vpop.f32.mrb[0].mxu0
        %v927 = vadd.f32 0.0, %v926
        %v928 = vpop.f32.mrb[0].mxu0
        %v929 = vadd.f32 0.0, %v928
        %v930 = vpop.f32.mrb[0].mxu0
        %v931 = vadd.f32 0.0, %v930
        %932 = vmatprep.mubr.bf16.mxu0 0
        %933 = vmatmul.mubr.bf16.gmra.mrb[0].mxu0 %v856
        %v934 = vpop.f32.mrb[0].mxu0
        %v935 = vadd.f32 0.0, %v934
        %v936 = vpop.f32.mrb[0].mxu0
        %v937 = vadd.f32 0.0, %v936
        %v938 = vpop.f32.mrb[0].mxu0
        %v939 = vadd.f32 0.0, %v938
        %v940 = vpop.f32.mrb[0].mxu0
        %v941 = vadd.f32 0.0, %v940
        %942 = vmatprep.mubr.bf16.mxu0 0
        %943 = vmatmul.mubr.bf16.gmra.mrb[0].mxu0 %v859
        %v944 = vpop.f32.mrb[0].mxu0
        %v945 = vadd.f32 0.0, %v944
        %v946 = vpop.f32.mrb[0].mxu0
        %v947 = vadd.f32 0.0, %v946
        %v948 = vpop.f32.mrb[0].mxu0
        %v949 = vadd.f32 0.0, %v948
        %v950 = vpop.f32.mrb[0].mxu0
        %v951 = vadd.f32 0.0, %v950
        %952 = vmatprep.mubr.bf16.mxu0 0
        %953 = vmatmul.mubr.bf16.gmra.mrb[0].mxu0 %v862
        %v954 = vpop.f32.mrb[0].mxu0
        %v955 = vadd.f32 0.0, %v954
        %v956 = vpop.f32.mrb[0].mxu0
        %v957 = vadd.f32 0.0, %v956
        %v958 = vpop.f32.mrb[0].mxu0
        %v959 = vadd.f32 0.0, %v958
        %v960 = vpop.f32.mrb[0].mxu0
        %v961 = vadd.f32 0.0, %v960
        %962 = vmatprep.mubr.bf16.mxu0 0
        %963 = vmatmul.mubr.bf16.gmra.mrb[0].mxu0 %v865
        %v964 = vpop.f32.mrb[0].mxu0
        %v965 = vadd.f32 0.0, %v964
        %v966 = vpop.f32.mrb[0].mxu0
        %v967 = vadd.f32 0.0, %v966
        %v968 = vpop.f32.mrb[0].mxu0
        %v969 = vadd.f32 0.0, %v968
        %v970 = vpop.f32.mrb[0].mxu0
        %v971 = vadd.f32 0.0, %v970
        %972 = vmatprep.mubr.bf16.mxu0 0
        %973 = vmatmul.mubr.bf16.gmra.mrb[0].mxu0 %v868
        %v974 = vpop.f32.mrb[0].mxu0
        %v975 = vadd.f32 0.0, %v974
        %v976 = vpop.f32.mrb[0].mxu0
        %v977 = vadd.f32 0.0, %v976
        %v978 = vpop.f32.mrb[0].mxu0
        %v979 = vadd.f32 0.0, %v978
        %v980 = vpop.f32.mrb[0].mxu0
        %v981 = vadd.f32 0.0, %v980
        %982 = vdwg.mxu0
        %v983 = vadd.f32 %v905, %v909
        %v984 = vadd.f32 %v983, %v915
        %v985 = vadd.f32 %v984, %v919
        %v986 = vadd.f32 %v985, %v925
        %v987 = vadd.f32 %v986, %v929
        %v988 = vadd.f32 %v987, %v935
        %v989 = vadd.f32 %v988, %v939
        %v990 = vadd.f32 %v989, %v945
        %v991 = vadd.f32 %v990, %v949
        %v992 = vadd.f32 %v991, %v955
        %v993 = vadd.f32 %v992, %v959
        %v994 = vadd.f32 %v993, %v965
        %v995 = vadd.f32 %v994, %v969
        %v996 = vadd.f32 %v995, %v975
        %v997 = vadd.f32 %v996, %v979
        %v998 = vrot.slane %v997, 4
        %v999 = vadd.f32 %v997, %v998
        %v1000 = vrot.slane %v999, 2
        %v1001 = vadd.f32 %v999, %v1000
        %v1002 = vrot.slane %v1001, 1
        %v1003 = vadd.f32 %v1001, %v1002
        %v1004 = vadd.f32 %v907, %v911
        %v1005 = vadd.f32 %v1004, %v917
        %v1006 = vadd.f32 %v1005, %v921
        %v1007 = vadd.f32 %v1006, %v927
        %v1008 = vadd.f32 %v1007, %v931
        %v1009 = vadd.f32 %v1008, %v937
        %v1010 = vadd.f32 %v1009, %v941
        %v1011 = vadd.f32 %v1010, %v947
        %v1012 = vadd.f32 %v1011, %v951
        %v1013 = vadd.f32 %v1012, %v957
        %v1014 = vadd.f32 %v1013, %v961
        %v1015 = vadd.f32 %v1014, %v967
        %v1016 = vadd.f32 %v1015, %v971
        %v1017 = vadd.f32 %v1016, %v977
        %v1018 = vadd.f32 %v1017, %v981
        %v1019 = vrot.slane %v1018, 4
        %v1020 = vadd.f32 %v1018, %v1019
        %v1021 = vrot.slane %v1020, 2
        %v1022 = vadd.f32 %v1020, %v1021
        %v1023 = vrot.slane %v1022, 1
        %v1024 = vadd.f32 %v1022, %v1023
        %v1025 = vmul.f32 %v905, %v905
        %v1026 = vmul.f32 %v907, %v907
        %v1027 = vmul.f32 %v909, %v909
        %v1028 = vmul.f32 %v911, %v911
        %v1029 = vmul.f32 %v915, %v915
        %v1030 = vmul.f32 %v917, %v917
        %v1031 = vmul.f32 %v919, %v919
        %v1032 = vmul.f32 %v921, %v921
        %v1033 = vmul.f32 %v925, %v925
        %v1034 = vmul.f32 %v927, %v927
        %v1035 = vmul.f32 %v929, %v929
        %v1036 = vmul.f32 %v931, %v931
        %v1037 = vmul.f32 %v935, %v935
        %v1038 = vmul.f32 %v937, %v937
        %v1039 = vmul.f32 %v939, %v939
        %v1040 = vmul.f32 %v941, %v941
        %v1041 = vmul.f32 %v945, %v945
        %v1042 = vmul.f32 %v947, %v947
        %v1043 = vmul.f32 %v949, %v949
        %v1044 = vmul.f32 %v951, %v951
        %v1045 = vmul.f32 %v955, %v955
        %v1046 = vmul.f32 %v957, %v957
        %v1047 = vmul.f32 %v959, %v959
        %v1048 = vmul.f32 %v961, %v961
        %v1049 = vmul.f32 %v965, %v965
        %v1050 = vmul.f32 %v967, %v967
        %v1051 = vmul.f32 %v969, %v969
        %v1052 = vmul.f32 %v971, %v971
        %v1053 = vmul.f32 %v975, %v975
        %v1054 = vmul.f32 %v977, %v977
        %v1055 = vmul.f32 %v979, %v979
        %v1056 = vmul.f32 %v981, %v981
        %v1057 = vadd.f32 %v1025, %v1027
        %v1058 = vadd.f32 %v1057, %v1029
        %v1059 = vadd.f32 %v1058, %v1031
        %v1060 = vadd.f32 %v1059, %v1033
        %v1061 = vadd.f32 %v1060, %v1035
        %v1062 = vadd.f32 %v1061, %v1037
        %v1063 = vadd.f32 %v1062, %v1039
        %v1064 = vadd.f32 %v1063, %v1041
        %v1065 = vadd.f32 %v1064, %v1043
        %v1066 = vadd.f32 %v1065, %v1045
        %v1067 = vadd.f32 %v1066, %v1047
        %v1068 = vadd.f32 %v1067, %v1049
        %v1069 = vadd.f32 %v1068, %v1051
        %v1070 = vadd.f32 %v1069, %v1053
        %v1071 = vadd.f32 %v1070, %v1055
        %v1072 = vrot.slane %v1071, 4
        %v1073 = vadd.f32 %v1071, %v1072
        %v1074 = vrot.slane %v1073, 2
        %v1075 = vadd.f32 %v1073, %v1074
        %v1076 = vrot.slane %v1075, 1
        %v1077 = vadd.f32 %v1075, %v1076
        %v1078 = vadd.f32 %v1026, %v1028
        %v1079 = vadd.f32 %v1078, %v1030
        %v1080 = vadd.f32 %v1079, %v1032
        %v1081 = vadd.f32 %v1080, %v1034
        %v1082 = vadd.f32 %v1081, %v1036
        %v1083 = vadd.f32 %v1082, %v1038
        %v1084 = vadd.f32 %v1083, %v1040
        %v1085 = vadd.f32 %v1084, %v1042
        %v1086 = vadd.f32 %v1085, %v1044
        %v1087 = vadd.f32 %v1086, %v1046
        %v1088 = vadd.f32 %v1087, %v1048
        %v1089 = vadd.f32 %v1088, %v1050
        %v1090 = vadd.f32 %v1089, %v1052
        %v1091 = vadd.f32 %v1090, %v1054
        %v1092 = vadd.f32 %v1091, %v1056
        %v1093 = vrot.slane %v1092, 4
        %v1094 = vadd.f32 %v1092, %v1093
        %v1095 = vrot.slane %v1094, 2
        %v1096 = vadd.f32 %v1094, %v1095
        %v1097 = vrot.slane %v1096, 1
        %v1098 = vadd.f32 %v1096, %v1097
        %v1099 = vmul.f32 %v1003, 0.0078125
        %v1100 = vmul.f32 %v1024, 0.0078125
        %v1101 = vmul.f32 %v1077, 0.0078125
        %v1102 = vmul.f32 %v1098, 0.0078125
        %v1103 = vmul.f32 %v1099, %v1099
        %v1104 = vmul.f32 %v1100, %v1100
        %v1105 = vsub.f32 %v1101, %v1103
        %v1106 = vsub.f32 %v1102, %v1104
        %v1107 = vadd.f32 %v1105, 1e-05
        %v1108 = vadd.f32 %v1106, 1e-05
        %v1109 = vrsqrt.pop %v1107
        %v1110 = vrsqrt.pop %v1108
        %v1113 = vcombine.low %v1109, %v1110
        %v1115 = vunpack.c.l.s4 1966171168
        %v1116 = vunpack.c.0.s8 %v1115
        %v1117 = vlaneseq
        %v1118 = vshrl.u32 %v1117, 7
        %v1119 = vsub.s32 %v1116, %v1118
        %v1120 = vrot.slane %v1113, %v1119
        %v1122 = vunpack.c.l.s4 1966171168
        %v1123 = vunpack.c.0.s8 %v1122
        %v1124 = vlaneseq
        %v1125 = vshrl.u32 %v1124, 7
        %v1126 = vsub.s32 %v1123, %v1125
        %v1127 = vrot.slane %v1120, %v1126
        %v1129 = vmul.f32 %v207, %v1127
        %v1131 = vlaneseq
        %v1132 = vshrl.u32 %v1131, 7
        %v1133 = vsub.s32 0, %v1132
        %v1134 = vrot.slane %v1129, %v1133
        %v1135 = vlaneseq
        %v1136 = vshrl.u32 %v1135, 7
        %v1137 = vsub.s32 1, %v1136
        %v1138 = vrot.slane %v1129, %v1137
        %v1141 = vmul.f32 %v1099, %v1134
        %v1142 = vmul.f32 %v1100, %v1138
        %v1145 = vcombine.low %v1141, %v1142
        %v1147 = vunpack.c.l.s4 1966171168
        %v1148 = vunpack.c.0.s8 %v1147
        %v1149 = vlaneseq
        %v1150 = vshrl.u32 %v1149, 7
        %v1151 = vsub.s32 %v1148, %v1150
        %v1152 = vrot.slane %v1145, %v1151
        %v1154 = vunpack.c.l.s4 1966171168
        %v1155 = vunpack.c.0.s8 %v1154
        %v1156 = vlaneseq
        %v1157 = vshrl.u32 %v1156, 7
        %v1158 = vsub.s32 %v1155, %v1157
        %v1159 = vrot.slane %v1152, %v1158
        %v1161 = vsub.f32 %v208, %v1159
        %v1162 = vmul.f32 %v905, %v1134
        %v1163 = vmul.f32 %v907, %v1138
        %v1164 = vmul.f32 %v909, %v1134
        %v1165 = vmul.f32 %v911, %v1138
        %v1166 = vmul.f32 %v915, %v1134
        %v1167 = vmul.f32 %v917, %v1138
        %v1168 = vmul.f32 %v919, %v1134
        %v1169 = vmul.f32 %v921, %v1138
        %v1170 = vmul.f32 %v925, %v1134
        %v1171 = vmul.f32 %v927, %v1138
        %v1172 = vmul.f32 %v929, %v1134
        %v1173 = vmul.f32 %v931, %v1138
        %v1174 = vmul.f32 %v935, %v1134
        %v1175 = vmul.f32 %v937, %v1138
        %v1176 = vmul.f32 %v939, %v1134
        %v1177 = vmul.f32 %v941, %v1138
        %v1178 = vmul.f32 %v945, %v1134
        %v1179 = vmul.f32 %v947, %v1138
        %v1180 = vmul.f32 %v949, %v1134
        %v1181 = vmul.f32 %v951, %v1138
        %v1182 = vmul.f32 %v955, %v1134
        %v1183 = vmul.f32 %v957, %v1138
        %v1184 = vmul.f32 %v959, %v1134
        %v1185 = vmul.f32 %v961, %v1138
        %v1186 = vmul.f32 %v965, %v1134
        %v1187 = vmul.f32 %v967, %v1138
        %v1188 = vmul.f32 %v969, %v1134
        %v1189 = vmul.f32 %v971, %v1138
        %v1190 = vmul.f32 %v975, %v1134
        %v1191 = vmul.f32 %v977, %v1138
        %v1192 = vmul.f32 %v979, %v1134
        %v1193 = vmul.f32 %v981, %v1138
        %v1195 = vlaneseq
        %v1196 = vshrl.u32 %v1195, 7
        %v1197 = vsub.s32 0, %v1196
        %v1198 = vrot.slane %v1161, %v1197
        %v1199 = vlaneseq
        %v1200 = vshrl.u32 %v1199, 7
        %v1201 = vsub.s32 1, %v1200
        %v1202 = vrot.slane %v1161, %v1201
        %v1205 = vadd.f32 %v1162, %v1198
        %v1206 = vadd.f32 %v1163, %v1202
        %v1207 = vadd.f32 %v1164, %v1198
        %v1208 = vadd.f32 %v1165, %v1202
        %v1209 = vadd.f32 %v1166, %v1198
        %v1210 = vadd.f32 %v1167, %v1202
        %v1211 = vadd.f32 %v1168, %v1198
        %v1212 = vadd.f32 %v1169, %v1202
        %v1213 = vadd.f32 %v1170, %v1198
        %v1214 = vadd.f32 %v1171, %v1202
        %v1215 = vadd.f32 %v1172, %v1198
        %v1216 = vadd.f32 %v1173, %v1202
        %v1217 = vadd.f32 %v1174, %v1198
        %v1218 = vadd.f32 %v1175, %v1202
        %v1219 = vadd.f32 %v1176, %v1198
        %v1220 = vadd.f32 %v1177, %v1202
        %v1221 = vadd.f32 %v1178, %v1198
        %v1222 = vadd.f32 %v1179, %v1202
        %v1223 = vadd.f32 %v1180, %v1198
        %v1224 = vadd.f32 %v1181, %v1202
        %v1225 = vadd.f32 %v1182, %v1198
        %v1226 = vadd.f32 %v1183, %v1202
        %v1227 = vadd.f32 %v1184, %v1198
        %v1228 = vadd.f32 %v1185, %v1202
        %v1229 = vadd.f32 %v1186, %v1198
        %v1230 = vadd.f32 %v1187, %v1202
        %v1231 = vadd.f32 %v1188, %v1198
        %v1232 = vadd.f32 %v1189, %v1202
        %v1233 = vadd.f32 %v1190, %v1198
        %v1234 = vadd.f32 %v1191, %v1202
        %v1235 = vadd.f32 %v1192, %v1198
        %v1236 = vadd.f32 %v1193, %v1202
        %v1237 = vsub.f32 0.0, %v1206
        %v1238 = vsub.f32 0.0, %v1208
        %v1239 = vsub.f32 0.0, %v1210
        %v1240 = vsub.f32 0.0, %v1212
        %v1241 = vsub.f32 0.0, %v1214
        %v1242 = vsub.f32 0.0, %v1216
        %v1243 = vsub.f32 0.0, %v1218
        %v1244 = vsub.f32 0.0, %v1220
        %v1245 = vsub.f32 0.0, %v1222
        %v1246 = vsub.f32 0.0, %v1224
        %v1247 = vsub.f32 0.0, %v1226
        %v1248 = vsub.f32 0.0, %v1228
        %v1249 = vsub.f32 0.0, %v1230
        %v1250 = vsub.f32 0.0, %v1232
        %v1251 = vsub.f32 0.0, %v1234
        %v1252 = vsub.f32 0.0, %v1236
        %v1253 = vmul.f32 %v1237, 1.442695
        %v1254 = vpow.pop %v1253
        %v1255 = vmul.f32 %v1238, 1.442695
        %v1256 = vpow.pop %v1255
        %v1257 = vmul.f32 %v1239, 1.442695
        %v1258 = vpow.pop %v1257
        %v1259 = vmul.f32 %v1240, 1.442695
        %v1260 = vpow.pop %v1259
        %v1261 = vmul.f32 %v1241, 1.442695
        %v1262 = vpow.pop %v1261
        %v1263 = vmul.f32 %v1242, 1.442695
        %v1264 = vpow.pop %v1263
        %v1265 = vmul.f32 %v1243, 1.442695
        %v1266 = vpow.pop %v1265
        %v1267 = vmul.f32 %v1244, 1.442695
        %v1268 = vpow.pop %v1267
        %v1269 = vmul.f32 %v1245, 1.442695
        %v1270 = vpow.pop %v1269
        %v1271 = vmul.f32 %v1246, 1.442695
        %v1272 = vpow.pop %v1271
        %v1273 = vmul.f32 %v1247, 1.442695
        %v1274 = vpow.pop %v1273
        %v1275 = vmul.f32 %v1248, 1.442695
        %v1276 = vpow.pop %v1275
        %v1277 = vmul.f32 %v1249, 1.442695
        %v1278 = vpow.pop %v1277
        %v1279 = vmul.f32 %v1250, 1.442695
        %v1280 = vpow.pop %v1279
        %v1281 = vmul.f32 %v1251, 1.442695
        %v1282 = vpow.pop %v1281
        %v1283 = vmul.f32 %v1252, 1.442695
        %v1284 = vpow.pop %v1283
        %v1285 = vadd.f32 %v1254, 1.0
        %v1286 = vadd.f32 %v1256, 1.0
        %v1287 = vadd.f32 %v1258, 1.0
        %v1288 = vadd.f32 %v1260, 1.0
        %v1289 = vadd.f32 %v1262, 1.0
        %v1290 = vadd.f32 %v1264, 1.0
        %v1291 = vadd.f32 %v1266, 1.0
        %v1292 = vadd.f32 %v1268, 1.0
        %v1293 = vadd.f32 %v1270, 1.0
        %v1294 = vadd.f32 %v1272, 1.0
        %v1295 = vadd.f32 %v1274, 1.0
        %v1296 = vadd.f32 %v1276, 1.0
        %v1297 = vadd.f32 %v1278, 1.0
        %v1298 = vadd.f32 %v1280, 1.0
        %v1299 = vadd.f32 %v1282, 1.0
        %v1300 = vadd.f32 %v1284, 1.0
        %v1301 = vrcp.pop %v1285
        %v1302 = vrcp.pop %v1286
        %v1303 = vrcp.pop %v1287
        %v1304 = vrcp.pop %v1288
        %v1305 = vrcp.pop %v1289
        %v1306 = vrcp.pop %v1290
        %v1307 = vrcp.pop %v1291
        %v1308 = vrcp.pop %v1292
        %v1309 = vrcp.pop %v1293
        %v1310 = vrcp.pop %v1294
        %v1311 = vrcp.pop %v1295
        %v1312 = vrcp.pop %v1296
        %v1313 = vrcp.pop %v1297
        %v1314 = vrcp.pop %v1298
        %v1315 = vrcp.pop %v1299
        %v1316 = vrcp.pop %v1300
        %v1317 = vmul.f32 %v1205, %v1301
        %v1318 = vmul.f32 %v1207, %v1302
        %v1319 = vmul.f32 %v1209, %v1303
        %v1320 = vmul.f32 %v1211, %v1304
        %v1321 = vmul.f32 %v1213, %v1305
        %v1322 = vmul.f32 %v1215, %v1306
        %v1323 = vmul.f32 %v1217, %v1307
        %v1324 = vmul.f32 %v1219, %v1308
        %v1325 = vmul.f32 %v1221, %v1309
        %v1326 = vmul.f32 %v1223, %v1310
        %v1327 = vmul.f32 %v1225, %v1311
        %v1328 = vmul.f32 %v1227, %v1312
        %v1329 = vmul.f32 %v1229, %v1313
        %v1330 = vmul.f32 %v1231, %v1314
        %v1331 = vmul.f32 %v1233, %v1315
        %v1332 = vmul.f32 %v1235, %v1316
        %v1333 = vpack.c.bf16 %v1318, %v1317
        %v1334 = vpack.c.bf16 %v1320, %v1319
        %v1335 = vpack.c.bf16 %v1322, %v1321
        %v1336 = vpack.c.bf16 %v1324, %v1323
        %v1337 = vpack.c.bf16 %v1326, %v1325
        %v1338 = vpack.c.bf16 %v1328, %v1327
        %v1339 = vpack.c.bf16 %v1330, %v1329
        %v1340 = vpack.c.bf16 %v1332, %v1331
        %v1349 = vunpack.c.l.b16 %v1333
        %v1350 = vunpack.c.h.b16 %v1333
        %v1351 = vunpack.c.l.b16 %v1334
        %v1352 = vunpack.c.h.b16 %v1334
        %v1353 = vunpack.c.l.b16 %v1335
        %v1354 = vunpack.c.h.b16 %v1335
        %v1355 = vunpack.c.l.b16 %v1336
        %v1356 = vunpack.c.h.b16 %v1336
        %v1357 = vunpack.c.l.b16 %v1337
        %v1358 = vunpack.c.h.b16 %v1337
        %v1359 = vunpack.c.l.b16 %v1338
        %v1360 = vunpack.c.h.b16 %v1338
        %v1361 = vunpack.c.l.b16 %v1339
        %v1362 = vunpack.c.h.b16 %v1339
        %v1363 = vunpack.c.l.b16 %v1340
        %v1364 = vunpack.c.h.b16 %v1340
        %v1365 = vpack.c.b16 %v1349, %v1349
        %v1366 = vpack.c.b16 %v1350, %v1350
        %v1367 = vpack.c.b16 %v1351, %v1351
        %v1368 = vpack.c.b16 %v1352, %v1352
        %v1369 = vpack.c.b16 %v1353, %v1353
        %v1370 = vpack.c.b16 %v1354, %v1354
        %v1371 = vpack.c.b16 %v1355, %v1355
        %v1372 = vpack.c.b16 %v1356, %v1356
        %v1373 = vpack.c.b16 %v1357, %v1357
        %v1374 = vpack.c.b16 %v1358, %v1358
        %v1375 = vpack.c.b16 %v1359, %v1359
        %v1376 = vpack.c.b16 %v1360, %v1360
        %v1377 = vpack.c.b16 %v1361, %v1361
        %v1378 = vpack.c.b16 %v1362, %v1362
        %v1379 = vpack.c.b16 %v1363, %v1363
        %v1380 = vpack.c.b16 %v1364, %v1364
        %s1397 = scalar_lea.vmem %s193, 64 [#allocation2]
        %1398 = vst [vmem:[%s1397] sm:$0xf] %v1365
        %1399 = vst [vmem:[%s1397 + $0x4] sm:$0xf] %v1366
        %1400 = vst [vmem:[%s1397 + $0x8] sm:$0xf] %v1367
        %1401 = vst [vmem:[%s1397 + $0xc] sm:$0xf] %v1368
        %1402 = vst [vmem:[%s1397 + $0x10] sm:$0xf] %v1369
        %1403 = vst [vmem:[%s1397 + $0x14] sm:$0xf] %v1370
        %1404 = vst [vmem:[%s1397 + $0x18] sm:$0xf] %v1371
        %1405 = vst [vmem:[%s1397 + $0x1c] sm:$0xf] %v1372
        %1406 = vst [vmem:[%s1397 + $0x20] sm:$0xf] %v1373
        %1407 = vst [vmem:[%s1397 + $0x24] sm:$0xf] %v1374
        %1408 = vst [vmem:[%s1397 + $0x28] sm:$0xf] %v1375
        %1409 = vst [vmem:[%s1397 + $0x2c] sm:$0xf] %v1376
        %1410 = vst [vmem:[%s1397 + $0x30] sm:$0xf] %v1377
        %1411 = vst [vmem:[%s1397 + $0x34] sm:$0xf] %v1378
        %1412 = vst [vmem:[%s1397 + $0x38] sm:$0xf] %v1379
        %1413 = vst [vmem:[%s1397 + $0x3c] sm:$0xf] %v1380
        %s1414 = sand.u32 %s115, 1
        %s1415 = scalar_lea.sflag [#allocation3], %s1414
        %s1416 = sand.u32 %s115, 1
        %s1417 = smul.addr %s1416, 128
        %s1418 = scalar_lea.vmem [#allocation2], %s1417
        // Predicated region
        $region37: #{tpu_custom_call.1} parent=35 // pred_check
          %p1419 = pneg %p125
        $region38: #{tpu_custom_call.1} parent=35 // pred_check_branch
          %1421 = sbr.rel (%p1419) target = $region40
        $region39: #{tpu_custom_call.1} parent=35 // pred_region
          %s1422 = smul.u32 2, %s18
          %s1424 = ssub.s32 2048, 2048
          %1425 = vsyncadd %s1415, %s1424
          %s1426 = smul.addr %s1422, 16
          %s1427 = smul.addr %s1426, 64
          %s1428 = scalar_lea.hbm %s4, %s1427
          %s1429 = sshll.u32 %s1418, 4
          %s1430 = int_to_ptr.vmem [resolvable:$true] %s1429
          %1435 = dma.vmem_to_hbm [thread:$0]  %s1430, 2048, %s1428, %s1415, 64, 64, 4
        $region40: #{tpu_custom_call.1} parent=35 // pred_fallthru
          _
      $region36: #{tpu_custom_call.1} parent=5 // pred_fallthru
        _
      %p1436 = scmp.le.s32.totalorder 2, %s13
      // Predicated region
      $region41: #{tpu_custom_call.1} parent=5 // pred_check
        %p1437 = pneg %p1436
      $region42: #{tpu_custom_call.1} parent=5 // pred_check_branch
        %1439 = sbr.rel (%p1437) target = $region44
      $region43: #{tpu_custom_call.1} parent=5 // pred_region
        %s1440 = ssub.s32 %s13, 2
        // Predicated region
        $region45: #{tpu_custom_call.1} parent=43 // pred_check
          %p1441 = pneg %p131
        $region46: #{tpu_custom_call.1} parent=43 // pred_check_branch
          %1443 = sbr.rel (%p1441) target = $region48
        $region47: #{tpu_custom_call.1} parent=43 // pred_region
          %s1444 = sand.u32 %s116, 1
          %s1445 = scalar_lea.sflag [#allocation3], %s1444
          %s1446 = sand.u32 %s116, 1
          %s1447 = smul.addr %s1446, 128
          %s1448 = scalar_lea.vmem [#allocation2], %s1447
          %1449 = dma.done %s1445, 2048
        $region48: #{tpu_custom_call.1} parent=43 // pred_fallthru
          _
      $region44: #{tpu_custom_call.1} parent=5 // pred_fallthru
        _
    $region6: #{tpu_custom_call.1} parent=1 // loop_footer
      %s17 = sadd.s32 1, %s13
    $region7: #{tpu_custom_call.1} parent=1 // loop_footer_branch
      %12 = sbr.rel target = $region3
    $region8: #{tpu_custom_call.1} parent=1 // loop_exit
      _
    %1450 = vsyncpa [#allocation3], 1
    %s1451 = scalar_lea.sflag [#allocation3], 1
    %1452 = vsyncpa %s1451, 1

</llo_original>
